<compile_context>
chip_gen: v7x
topology: tpu7x:2x2x1
jax: 0.10.0
libtpu: 0.0.40
codegen_flags: <defaults>
</compile_context>

<pallas_src>
import jax
import jax.numpy as jnp
from jax.experimental import pallas as pl
from jax.experimental.pallas import tpu as pltpu


def _mish_kernel(x_ref, o_ref):
    # One (block_rows, cols) lane-dense tile.  Compute in f32, store in the
    # output dtype.  Only VPU mul/add/select + one EUP exp + one divide.
    xf = x_ref[...].astype(jnp.float32)
    a = jnp.exp(-jnp.abs(xf))                       # overflow-free, a in (0, 1]
    two_a = a + a
    a2 = a * a
    pos = xf >= 0.0
    num = jnp.where(pos, 1.0 + two_a, a2 + two_a)   # numerator of tanh(softplus)
    den = num + jnp.where(pos, a2 + a2, 2.0)        # matching denominator
    o_ref[...] = (xf * (num / den)).astype(o_ref.dtype)


def _mish_jnp(x):
    """Pure-JAX reference / fallback matching PyTorch: x * tanh(softplus(x))."""
    return x * jnp.tanh(jax.nn.softplus(x))


def mish(x, *, target_block_bytes=2 << 20, min_kernel_bytes=256 << 10):
    """Elementwise Mish over an arbitrarily shaped array via a tiled 2-D view."""
    orig_shape = x.shape
    dtype = x.dtype
    n = x.size
    itemsize = dtype.itemsize

    # ---- small-n fast path: launch / per-step overhead would dominate ----
    if n == 0 or n * itemsize < min_kernel_bytes:
        return _mish_jnp(x)

    # ---- lane-dense 2-D view, no padding ---------------------------------
    cols = next((c for c in (512, 256, 128) if n % c == 0), 0)
    if cols == 0:
        # TODO(synk): element counts not a multiple of 128 fall back to XLA's
        # fused elementwise rather than paying a pad+slice HBM round-trip.
        return _mish_jnp(x)
    rows = n // cols

    # ---- block sizing -----------------------------------------------------
    sublane = max(8, 32 // itemsize)              # 8 f32 / 16 bf16 / 32 int8
    if rows <= sublane:
        block_rows = rows                         # single full-dim block
    else:
        bytes_per_row = cols * itemsize
        br = max(1, target_block_bytes // bytes_per_row)
        br = min(br, -(-rows // 4))               # keep >= ~4 grid steps
        br = (br // sublane) * sublane            # dtype-native sublane align
        block_rows = max(sublane, br)

    grid = (pl.cdiv(rows, block_rows),)           # ragged last block is masked

    # double-buffered input + output blocks, plus headroom for Mosaic scratch
    block_bytes = block_rows * cols * itemsize
    vmem_limit = int(min(4 * block_bytes + (8 << 20), 48 << 20))

    x2d = x.reshape(rows, cols)

    out2d = pl.pallas_call(
        _mish_kernel,
        out_shape=jax.ShapeDtypeStruct((rows, cols), dtype),
        grid_spec=pltpu.PrefetchScalarGridSpec(
            num_scalar_prefetch=0,
            grid=grid,
            in_specs=[pl.BlockSpec((block_rows, cols), lambda i: (i, 0))],
            out_specs=pl.BlockSpec((block_rows, cols), lambda i: (i, 0)),
        ),
        compiler_params=pltpu.CompilerParams(
            dimension_semantics=("parallel",),
            vmem_limit_bytes=vmem_limit,
        ),
    )(x2d)

    return out2d.reshape(orig_shape)


if __name__ == "__main__":
    key = jax.random.PRNGKey(0)
    k1, k2 = jax.random.split(key)

    # Small shape consistent with the module's usage (B, C, H, W); force the
    # Pallas path so the kernel itself is exercised.
    x_small = jax.random.normal(k1, (2, 4, 16, 16), dtype=jnp.float32) * 3.0
    out_small = jax.block_until_ready(mish(x_small, min_kernel_bytes=0))
    ref_small = _mish_jnp(x_small)
    assert out_small.shape == x_small.shape
    assert jnp.allclose(out_small, ref_small, atol=1e-5, rtol=1e-5), \
        "small-shape mismatch vs reference"

    # Larger activation exercising the tiled, pipelined, multi-step grid path.
    x_big = jax.random.normal(k2, (8, 16, 64, 64), dtype=jnp.float32) * 3.0
    out_big = jax.block_until_ready(mish(x_big))
    ref_big = _mish_jnp(x_big)
    assert out_big.shape == x_big.shape
    assert jnp.allclose(out_big, ref_big, atol=1e-5, rtol=1e-5), \
        "large-shape mismatch vs reference"

    print("KERNEL_OK")
</pallas_src>

<mosaic_0001>
module attributes {stable_mosaic.version = 11 : i64} {
  func.func @_mish_kernel(%arg0: i32, %arg1: memref<4x512xf32, #tpu.memory_space<vmem>>, %arg2: memref<4x512xf32, #tpu.memory_space<vmem>>) attributes {dimension_semantics = [#tpu.dimension_semantics<parallel>], iteration_bounds = array<i64: 1>, scalar_prefetch = 0 : i64, scratch_operands = 0 : i64, tpu.core_type = #tpu.core_type<tc>, window_params = [{transform_indices = @transform_0, window_bounds = array<i64: 4, 512>}, {transform_indices = @transform_1, window_bounds = array<i64: 4, 512>}]} {
    %c0 = arith.constant 0 : index
    %c0_0 = arith.constant 0 : index
    %0 = vector.load %arg1[%c0, %c0_0] : memref<4x512xf32, #tpu.memory_space<vmem>>, vector<4x512xf32>
    %1 = math.absf %0 : vector<4x512xf32>
    %cst = arith.constant 0.000000e+00 : f32
    %2 = vector.broadcast %cst : f32 to vector<4x512xf32>
    %3 = arith.subf %2, %1 : vector<4x512xf32>
    %4 = math.exp %3 : vector<4x512xf32>
    %5 = arith.addf %4, %4 : vector<4x512xf32>
    %6 = arith.mulf %4, %4 : vector<4x512xf32>
    %cst_1 = arith.constant 0.000000e+00 : f32
    %7 = vector.broadcast %cst_1 : f32 to vector<4x512xf32>
    %8 = arith.cmpf oge, %0, %7 : vector<4x512xf32>
    %cst_2 = arith.constant 1.000000e+00 : f32
    %9 = vector.broadcast %cst_2 : f32 to vector<4x512xf32>
    %10 = arith.addf %9, %5 : vector<4x512xf32>
    %11 = arith.addf %6, %5 : vector<4x512xf32>
    %12 = arith.select %8, %10, %11 : vector<4x512xi1>, vector<4x512xf32>
    %13 = arith.addf %6, %6 : vector<4x512xf32>
    %cst_3 = arith.constant 2.000000e+00 : f32
    %14 = vector.broadcast %cst_3 : f32 to vector<4x512xf32>
    %15 = arith.select %8, %13, %14 : vector<4x512xi1>, vector<4x512xf32>
    %16 = arith.addf %12, %15 : vector<4x512xf32>
    %17 = arith.divf %12, %16 : vector<4x512xf32>
    %18 = arith.mulf %0, %17 : vector<4x512xf32>
    %c0_4 = arith.constant 0 : index
    %c0_5 = arith.constant 0 : index
    %19 = vector.load %arg2[%c0_4, %c0_5] : memref<4x512xf32, #tpu.memory_space<vmem>>, vector<4x512xf32>
    tpu.vector_store %arg2[%c0_4, %c0_5], %18 {strides = array<i32>} : memref<4x512xf32, #tpu.memory_space<vmem>>, vector<4x512xf32>,
    return
  }
  func.func @transform_0(%arg0: i32) -> (i32, i32) {
    %c0_i32 = arith.constant 0 : i32
    %c0_i32_0 = arith.constant 0 : i32
    return %arg0, %c0_i32 : i32, i32
  }
  func.func @transform_1(%arg0: i32) -> (i32, i32) {
    %c0_i32 = arith.constant 0 : i32
    %c0_i32_0 = arith.constant 0 : i32
    return %arg0, %c0_i32 : i32, i32
  }
}

</mosaic_0001>

<llo_original>
// kernel: tpu_custom_call.1
$region0: #{tpu_custom_call.1}
  #allocation0 [shape = 'u32[]', space=smem, size = 0x4, offset = 0x4, fixed_abs, tag = 'smem constant byte address 0x4 - core index']
  #allocation1 [shape = 'u32[144,128]{1,0:T(1,128)}', space=vmem, size = 0x12000, scoped, tag = 'internal scratch']
  %s0 = inlined_call_operand.hbm [shape: f32[4,512], index: 0, kind: input, shape index: {}]
  %s1 = inlined_call_operand.hbm [shape: f32[4,512], index: 1, kind: output, shape index: {}]
  %s2 = sld [smem:[#allocation0]]
  $region18: #{tpu_custom_call.1} parent=0
    _
  %s4 = ssub.s32 1, %s2
  %s5 = scalar_select 0, %s4, %s2
  $region1: #{tpu_custom_call.1} parent=0
    #allocation2 [shape = 'u8[8192]{0}', space=vmem, size = 0x2000, scoped, tag = 'input window, operand 0, single buffered']
    #allocation3 [shape = 's32[1]{0}', space=sflag, size = 0x4, scoped, tag = 'scoped memory for tpu_custom_call.1']
    #allocation4 [shape = 's32[1]{0}', space=sflag, size = 0x4, scoped, tag = 'scoped memory for tpu_custom_call.1']
    #allocation5 [shape = 'u8[8192]{0}', space=vmem, size = 0x2000, scoped, tag = 'output window, operand 0, single buffered']
    %6 = vsyncpa [#allocation3], 0
    %7 = vsyncpa [#allocation4], 0
    // Predicated region
    $region2: #{tpu_custom_call.1} parent=1 // pred_check
      _
    $region3: #{tpu_custom_call.1} parent=1 // pred_check_branch
      %9 = sbr.rel (0) target = $region5
    $region4: #{tpu_custom_call.1} parent=1 // pred_region
      %s11 = ssub.s32 256, 256
      %12 = vsyncadd [#allocation3], %s11
      %s14 = sshll.u32 [#allocation2], 4
      %s15 = int_to_ptr.vmem [resolvable:$true] %s14
      %17 = dma.hbm_to_vmem [thread:$0]  %s0, 256, %s15, [#allocation3]
    $region5: #{tpu_custom_call.1} parent=1 // pred_fallthru
      _
    // Predicated region
    $region6: #{tpu_custom_call.1} parent=1 // pred_check
      _
    $region7: #{tpu_custom_call.1} parent=1 // pred_check_branch
      %19 = sbr.rel (0) target = $region9
    $region8: #{tpu_custom_call.1} parent=1 // pred_region
      %20 = dma.done [#allocation3], 256
    $region9: #{tpu_custom_call.1} parent=1 // pred_fallthru
      _
    %v21 = vld [vmem:[#allocation2] sm:$0xff]
    %v22 = vld [vmem:[#allocation2 + $0x8] sm:$0xff]
    %v23 = vand.u32 2147483647, %v21
    %v24 = vand.u32 2147483647, %v22
    %v25 = vsub.f32 0.0, %v23
    %v26 = vsub.f32 0.0, %v24
    %v27 = vmul.f32 %v25, 1.442695
    %v28 = vpow.pop %v27
    %v29 = vmul.f32 %v26, 1.442695
    %v30 = vpow.pop %v29
    %v31 = vadd.f32 %v28, %v28
    %v32 = vadd.f32 %v30, %v30
    %v33 = vmul.f32 %v28, %v28
    %v34 = vmul.f32 %v30, %v30
    %vm35 = vcmp.ge.f32.partialorder %v21, 0.0
    %vm36 = vcmp.ge.f32.partialorder %v22, 0.0
    %v37 = vadd.f32 %v31, 1.0
    %v38 = vadd.f32 %v32, 1.0
    %v39 = vadd.f32 %v33, %v31
    %v40 = vadd.f32 %v34, %v32
    %v41 = vsel %vm35, %v37, %v39
    %v42 = vsel %vm36, %v38, %v40
    %v43 = vadd.f32 %v33, %v33
    %v44 = vadd.f32 %v34, %v34
    %v45 = vsel %vm35, %v43, 2.0
    %v46 = vsel %vm36, %v44, 2.0
    %v47 = vadd.f32 %v41, %v45
    %v48 = vadd.f32 %v42, %v46
    %v49 = vrcp.pop %v47
    %v50 = vmul.f32 %v41, %v49
    %v51 = vrcp.pop %v48
    %v52 = vmul.f32 %v42, %v51
    %v53 = vmul.f32 %v21, %v50
    %v54 = vmul.f32 %v22, %v52
    %55 = vst [vmem:[#allocation5] sm:$0xff] %v53
    %56 = vst [vmem:[#allocation5 + $0x8] sm:$0xff] %v54
    // Predicated region
    $region10: #{tpu_custom_call.1} parent=1 // pred_check
      _
    $region11: #{tpu_custom_call.1} parent=1 // pred_check_branch
      %58 = sbr.rel (0) target = $region13
    $region12: #{tpu_custom_call.1} parent=1 // pred_region
      %s60 = ssub.s32 256, 256
      %61 = vsyncadd [#allocation4], %s60
      %s63 = sshll.u32 [#allocation5], 4
      %s64 = int_to_ptr.vmem [resolvable:$true] %s63
      %66 = dma.vmem_to_hbm [thread:$0]  %s64, 256, %s1, [#allocation4]
    $region13: #{tpu_custom_call.1} parent=1 // pred_fallthru
      _
    // Predicated region
    $region14: #{tpu_custom_call.1} parent=1 // pred_check
      _
    $region15: #{tpu_custom_call.1} parent=1 // pred_check_branch
      %68 = sbr.rel (0) target = $region17
    $region16: #{tpu_custom_call.1} parent=1 // pred_region
      %69 = dma.done [#allocation4], 256
    $region17: #{tpu_custom_call.1} parent=1 // pred_fallthru
      _
    %70 = vsyncpa [#allocation3], 1
    %71 = vsyncpa [#allocation4], 1

</llo_original>
